<compile_context>
chip_gen: v6e
topology: v6e:2x2x1
jax: 0.10.0
libtpu: 0.0.40
codegen_flags: <defaults>
</compile_context>

<pallas_src>
import functools

import jax
import jax.numpy as jnp
from jax.experimental import pallas as pl
from jax.experimental.pallas import tpu as pltpu


def _round_up(x, m):
    return ((x + m - 1) // m) * m


# ------------------------------------------------------------------
# Tiled matmul + fused bias (MXU), f32 accumulator, K-axis reduction
# ------------------------------------------------------------------
def _matmul_bias_kernel(x_ref, w_ref, b_ref, o_ref, acc_ref):
    k = pl.program_id(2)

    @pl.when(k == 0)
    def _init():
        acc_ref[...] = jnp.zeros_like(acc_ref)

    acc_ref[...] += jnp.dot(x_ref[...], w_ref[...],
                            preferred_element_type=jnp.float32)

    @pl.when(k == pl.num_programs(2) - 1)
    def _finalize():
        o_ref[...] = (acc_ref[...] + b_ref[...]).astype(o_ref.dtype)


def matmul_bias(x, w, b, *, tm_pref=512, tn_pref=256, tk_pref=512):
    """x: (M, K) @ w: (K, N) + b: (N,) -> (M, N); tiled & pipelined on TPU."""
    M, K = x.shape
    K2, N = w.shape
    assert K == K2, (K, K2)

    # Tile sizes respecting the (8, 128) layout constraint; lane-dense output.
    tm = min(tm_pref, _round_up(M, 8))
    tn = min(tn_pref, _round_up(N, 128))
    tk = min(tk_pref, _round_up(K, 128))

    Mp, Kp, Np = _round_up(M, tm), _round_up(K, tk), _round_up(N, tn)
    xp = jnp.pad(x, ((0, Mp - M), (0, Kp - K)))
    wp = jnp.pad(w, ((0, Kp - K), (0, Np - N)))
    bp = jnp.pad(b, (0, Np - N)).reshape(1, Np)

    grid = (Mp // tm, Np // tn, Kp // tk)

    # VMEM budget: double-buffered inputs/outputs + f32 accumulator scratch.
    vmem_bytes = 4 * (2 * tm * tk + 2 * tk * tn + 2 * tn + 2 * tm * tn + tm * tn)
    vmem_limit = int(min(64 * 1024 * 1024, max(2 * vmem_bytes, 16 * 1024 * 1024)))

    out = pl.pallas_call(
        _matmul_bias_kernel,
        out_shape=jax.ShapeDtypeStruct((Mp, Np), jnp.float32),
        grid_spec=pltpu.PrefetchScalarGridSpec(
            num_scalar_prefetch=0,
            grid=grid,
            in_specs=[
                pl.BlockSpec((tm, tk), lambda i, j, k: (i, k)),
                pl.BlockSpec((tk, tn), lambda i, j, k: (k, j)),
                pl.BlockSpec((1, tn), lambda i, j, k: (0, j)),
            ],
            out_specs=pl.BlockSpec((tm, tn), lambda i, j, k: (i, j)),
            scratch_shapes=[pltpu.VMEM((tm, tn), jnp.float32)],
        ),
        compiler_params=pltpu.CompilerParams(
            dimension_semantics=("parallel", "parallel", "arbitrary"),
            vmem_limit_bytes=vmem_limit,
        ),
    )(xp, wp, bp)
    return out[:M, :N]


# ------------------------------------------------------------------
# im2col patch gather (plain-JAX glue; ~1.13x expansion for k=P+1, s=P)
# ------------------------------------------------------------------
def _im2col(x_nchw, K, stride, pad):
    """(B, C, H, W) -> (B*OH*OW, C*K*K); column order (C, Kh, Kw) matches the
    PyTorch Conv2d weight layout (Cout, Cin, Kh, Kw)."""
    B, C, H, W = x_nchw.shape
    xp = jnp.pad(x_nchw, ((0, 0), (0, 0), (pad, pad), (pad, pad)))
    OH = (H + 2 * pad - K) // stride + 1
    OW = (W + 2 * pad - K) // stride + 1
    cols = []
    for kh in range(K):
        for kw in range(K):
            cols.append(
                xp[:, :, kh:kh + stride * OH:stride, kw:kw + stride * OW:stride])
    patches = jnp.stack(cols, axis=0).reshape(K, K, B, C, OH, OW)
    patches = patches.transpose(2, 4, 5, 3, 0, 1)  # (B, OH, OW, C, Kh, Kw)
    return patches.reshape(B * OH * OW, C * K * K), OH, OW


# ------------------------------------------------------------------
# PatchEmbedding forward
# ------------------------------------------------------------------
def patch_embedding_forward(x, w, b, *, patch_size):
    """x: (B, Cin, H, W); w: (E, Cin, P+1, P+1); b: (E,).
    Returns (tokens (B, N, E), (OH, OW)) -- same as the PyTorch module."""
    B = x.shape[0]
    E, Cin, K, _ = w.shape
    cols, OH, OW = _im2col(x, K, stride=patch_size, pad=patch_size // 2)
    wmat = jnp.transpose(w.reshape(E, Cin * K * K))      # (Cin*K*K, E): E on lanes
    tokens = matmul_bias(cols, wmat, b)                  # (B*OH*OW, E)
    # Rows are already ordered (B, OH*OW), so a single reshape gives the
    # (B, N, E) result of PyTorch's flatten(2).transpose(1, 2) -- no NCHW
    # feature-map materialization or transpose through HBM.
    return tokens.reshape(B, OH * OW, E), (OH, OW)


# ------------------------------------------------------------------
if __name__ == "__main__":
    # Small config consistent with PatchEmbedding(in_ch=3, embed_dim=128, patch_size=8)
    B, in_ch, img_size = 2, 3, 32
    embed_dim, patch_size = 128, 8
    ksize = patch_size + 1

    key = jax.random.PRNGKey(0)
    kx, kw, kb = jax.random.split(key, 3)
    x = jax.random.normal(kx, (B, in_ch, img_size, img_size), dtype=jnp.float32)
    w = (0.02 * jax.random.normal(kw, (embed_dim, in_ch, ksize, ksize))).astype(jnp.float32)
    b = (0.02 * jax.random.normal(kb, (embed_dim,))).astype(jnp.float32)

    fwd = jax.jit(functools.partial(patch_embedding_forward, patch_size=patch_size))
    tokens, (OH, OW) = fwd(x, w, b)
    tokens = jax.block_until_ready(tokens)
    OH, OW = int(OH), int(OW)
    N = OH * OW

    assert tokens.shape == (B, N, embed_dim), tokens.shape
    assert bool(jnp.all(jnp.isfinite(tokens)))

    # Pure-JAX reference (same im2col, XLA dot) sanity check.
    cols_ref, _, _ = _im2col(x, ksize, patch_size, patch_size // 2)
    ref = (cols_ref @ jnp.transpose(w.reshape(embed_dim, -1)) + b).reshape(B, N, embed_dim)
    err = float(jnp.max(jnp.abs(tokens - ref)))
    assert err < 2e-2, f"max abs err {err}"

    print("KERNEL_OK")
</pallas_src>

<mosaic_0001>
module attributes {stable_mosaic.version = 11 : i64} {
  func.func @_matmul_bias_kernel(%arg0: i32, %arg1: i32, %arg2: i32, %arg3: memref<32x256xf32, #tpu.memory_space<vmem>>, %arg4: memref<256x128xf32, #tpu.memory_space<vmem>>, %arg5: memref<1x128xf32, #tpu.memory_space<vmem>>, %arg6: memref<32x128xf32, #tpu.memory_space<vmem>>, %arg7: memref<32x128xf32, #tpu.memory_space<vmem>>) attributes {dimension_semantics = [#tpu.dimension_semantics<parallel>, #tpu.dimension_semantics<parallel>, #tpu.dimension_semantics<arbitrary>], iteration_bounds = array<i64: 1, 1, 1>, scalar_prefetch = 0 : i64, scratch_operands = 1 : i64, tpu.core_type = #tpu.core_type<tc>, window_params = [{transform_indices = @transform_0, window_bounds = array<i64: 32, 256>}, {transform_indices = @transform_1, window_bounds = array<i64: 256, 128>}, {transform_indices = @transform_2, window_bounds = array<i64: 1, 128>}, {transform_indices = @transform_3, window_bounds = array<i64: 32, 128>}]} {
    %c0_i32 = arith.constant 0 : i32
    %0 = arith.cmpi eq, %arg2, %c0_i32 : i32
    %1 = arith.extui %0 : i1 to i32
    %c0_i32_0 = arith.constant 0 : i32
    %2 = arith.cmpi ne, %1, %c0_i32_0 : i32
    scf.if %2 {
      %cst_10 = arith.constant 0.000000e+00 : f32
      %12 = vector.broadcast %cst_10 : f32 to vector<32x128xf32>
      %c0_11 = arith.constant 0 : index
      %c0_12 = arith.constant 0 : index
      %13 = vector.load %arg7[%c0_11, %c0_12] : memref<32x128xf32, #tpu.memory_space<vmem>>, vector<32x128xf32>
      tpu.vector_store %arg7[%c0_11, %c0_12], %12 {strides = array<i32>} : memref<32x128xf32, #tpu.memory_space<vmem>>, vector<32x128xf32>,
    } else {
    }
    %c0 = arith.constant 0 : index
    %c0_1 = arith.constant 0 : index
    %3 = vector.load %arg7[%c0, %c0_1] : memref<32x128xf32, #tpu.memory_space<vmem>>, vector<32x128xf32>
    %c0_2 = arith.constant 0 : index
    %c0_3 = arith.constant 0 : index
    %4 = vector.load %arg3[%c0_2, %c0_3] : memref<32x256xf32, #tpu.memory_space<vmem>>, vector<32x256xf32>
    %c0_4 = arith.constant 0 : index
    %c0_5 = arith.constant 0 : index
    %5 = vector.load %arg4[%c0_4, %c0_5] : memref<256x128xf32, #tpu.memory_space<vmem>>, vector<256x128xf32>
    %cst = arith.constant dense<0.000000e+00> : vector<32x128xf32>
    %6 = tpu.matmul %4, %5, %cst {dimension_numbers = #tpu.dot_dimension_numbers<[1], [0], [0], [1], [0, 0, 1, 1], [], []>} : vector<32x256xf32>, vector<256x128xf32>, vector<32x128xf32> -> vector<32x128xf32>
    %7 = arith.addf %3, %6 : vector<32x128xf32>
    %c0_6 = arith.constant 0 : index
    %c0_7 = arith.constant 0 : index
    %8 = vector.load %arg7[%c0_6, %c0_7] : memref<32x128xf32, #tpu.memory_space<vmem>>, vector<32x128xf32>
    tpu.vector_store %arg7[%c0_6, %c0_7], %7 {strides = array<i32>} : memref<32x128xf32, #tpu.memory_space<vmem>>, vector<32x128xf32>,
    %c0_i32_8 = arith.constant 0 : i32
    %9 = arith.cmpi eq, %arg2, %c0_i32_8 : i32
    %10 = arith.extui %9 : i1 to i32
    %c0_i32_9 = arith.constant 0 : i32
    %11 = arith.cmpi ne, %10, %c0_i32_9 : i32
    scf.if %11 {
      %c0_10 = arith.constant 0 : index
      %c0_11 = arith.constant 0 : index
      %12 = vector.load %arg7[%c0_10, %c0_11] : memref<32x128xf32, #tpu.memory_space<vmem>>, vector<32x128xf32>
      %c0_12 = arith.constant 0 : index
      %c0_13 = arith.constant 0 : index
      %13 = vector.load %arg5[%c0_12, %c0_13] : memref<1x128xf32, #tpu.memory_space<vmem>>, vector<1x128xf32>
      %14 = vector.broadcast %13 : vector<1x128xf32> to vector<32x128xf32>
      %15 = arith.addf %12, %14 : vector<32x128xf32>
      %c0_14 = arith.constant 0 : index
      %c0_15 = arith.constant 0 : index
      %16 = vector.load %arg6[%c0_14, %c0_15] : memref<32x128xf32, #tpu.memory_space<vmem>>, vector<32x128xf32>
      tpu.vector_store %arg6[%c0_14, %c0_15], %15 {strides = array<i32>} : memref<32x128xf32, #tpu.memory_space<vmem>>, vector<32x128xf32>,
    } else {
    }
    return
  }
  func.func @transform_0(%arg0: i32, %arg1: i32, %arg2: i32) -> (i32, i32) {
    %c0_i32 = arith.constant 0 : i32
    return %arg0, %arg2 : i32, i32
  }
  func.func @transform_1(%arg0: i32, %arg1: i32, %arg2: i32) -> (i32, i32) {
    %c0_i32 = arith.constant 0 : i32
    return %arg2, %arg1 : i32, i32
  }
  func.func @transform_2(%arg0: i32, %arg1: i32, %arg2: i32) -> (i32, i32) {
    %c0_i32 = arith.constant 0 : i32
    %c0_i32_0 = arith.constant 0 : i32
    return %c0_i32, %arg1 : i32, i32
  }
  func.func @transform_3(%arg0: i32, %arg1: i32, %arg2: i32) -> (i32, i32) {
    %c0_i32 = arith.constant 0 : i32
    return %arg0, %arg1 : i32, i32
  }
}

</mosaic_0001>

<llo_original>
// kernel: patch_embedding_forward.1
$region0: #{patch_embedding_forward.1}
  #allocation0 [shape = 'u32[]', space=smem, size = 0x4, offset = 0x4, fixed_abs, tag = 'smem constant byte address 0x4 - core index']
  #allocation1 [shape = 'u32[144,128]{1,0:T(1,128)}', space=vmem, size = 0x12000, scoped, tag = 'internal scratch']
  #allocation2 [shape = 'f32[32,128]{1,0:T(8,128)}', space=vmem, size = 0x4000, scoped, tag = 'scratch operand']
  %s0 = inlined_call_operand.vmem [shape: f32[32,256], index: 0, kind: input, shape index: {}]
  %s1 = inlined_call_operand.vmem [shape: f32[256,128], index: 1, kind: input, shape index: {}]
  %s2 = inlined_call_operand.vmem [shape: f32[1,128], index: 2, kind: input, shape index: {}]
  %s3 = inlined_call_operand.hbm [shape: f32[32,128], index: 3, kind: output, shape index: {}]
  %s4 = sld [smem:[#allocation0]]
  $region30: #{patch_embedding_forward.1} parent=0
    _
  %s6 = ssub.s32 1, %s4
  %s7 = scalar_select 0, %s6, %s4
  $region1: #{patch_embedding_forward.1} parent=0
    #allocation3 [shape = 'u8[16384]{0}', space=vmem, size = 0x4000, scoped, tag = 'output window, operand 0, single buffered']
    #allocation4 [shape = 's32[1]{0}', space=sflag, size = 0x4, scoped, tag = 'scoped memory for patch_embedding_forward.1']
    %8 = vsyncpa [#allocation4], 0
    // Predicated region
    $region2: #{patch_embedding_forward.1} parent=1 // pred_check
      _
    $region3: #{patch_embedding_forward.1} parent=1 // pred_check_branch
      %10 = sbr.rel (0) target = $region5
    $region4: #{patch_embedding_forward.1} parent=1 // pred_region
      _
    $region5: #{patch_embedding_forward.1} parent=1 // pred_fallthru
      _
    // Predicated region
    $region6: #{patch_embedding_forward.1} parent=1 // pred_check
      _
    $region7: #{patch_embedding_forward.1} parent=1 // pred_check_branch
      %12 = sbr.rel (0) target = $region9
    $region8: #{patch_embedding_forward.1} parent=1 // pred_region
      _
    $region9: #{patch_embedding_forward.1} parent=1 // pred_fallthru
      _
    // Predicated region
    $region10: #{patch_embedding_forward.1} parent=1 // pred_check
      _
    $region11: #{patch_embedding_forward.1} parent=1 // pred_check_branch
      %14 = sbr.rel (0) target = $region13
    $region12: #{patch_embedding_forward.1} parent=1 // pred_region
      _
    $region13: #{patch_embedding_forward.1} parent=1 // pred_fallthru
      _
    %p15 = scmp.eq.s32.totalorder 0, 0
    // Predicated region
    $region14: #{patch_embedding_forward.1} parent=1 // pred_check
      %p16 = pneg %p15
    $region15: #{patch_embedding_forward.1} parent=1 // pred_check_branch
      %18 = sbr.rel (%p16) target = $region17
    $region16: #{patch_embedding_forward.1} parent=1 // pred_region
      %19 = vst [vmem:[#allocation2] sm:$0xff] 0.0
      %20 = vst [vmem:[#allocation2 + $0x8] sm:$0xff] 0.0
      %21 = vst [vmem:[#allocation2 + $0x10] sm:$0xff] 0.0
      %22 = vst [vmem:[#allocation2 + $0x18] sm:$0xff] 0.0
    $region17: #{patch_embedding_forward.1} parent=1 // pred_fallthru
      _
    %v23 = vld [vmem:[#allocation2] sm:$0xff]
    %v24 = vld [vmem:[#allocation2 + $0x8] sm:$0xff]
    %v25 = vld [vmem:[#allocation2 + $0x10] sm:$0xff]
    %v26 = vld [vmem:[#allocation2 + $0x18] sm:$0xff]
    %v27 = vld [vmem:[%s0] sm:$0xff]
    %v28 = vld [vmem:[%s0 + $0x8] sm:$0xff]
    %v29 = vld [vmem:[%s0 + $0x10] sm:$0xff]
    %v30 = vld [vmem:[%s0 + $0x18] sm:$0xff]
    %v31 = vld [vmem:[%s0 + $0x20] sm:$0xff]
    %v32 = vld [vmem:[%s0 + $0x28] sm:$0xff]
    %v33 = vld [vmem:[%s0 + $0x30] sm:$0xff]
    %v34 = vld [vmem:[%s0 + $0x38] sm:$0xff]
    %v35 = vld [vmem:[%s1] sm:$0xff]
    %v36 = vld [vmem:[%s1 + $0x8] sm:$0xff]
    %v37 = vld [vmem:[%s1 + $0x10] sm:$0xff]
    %v38 = vld [vmem:[%s1 + $0x18] sm:$0xff]
    %v39 = vld [vmem:[%s1 + $0x20] sm:$0xff]
    %v40 = vld [vmem:[%s1 + $0x28] sm:$0xff]
    %v41 = vld [vmem:[%s1 + $0x30] sm:$0xff]
    %v42 = vld [vmem:[%s1 + $0x38] sm:$0xff]
    %v43 = vld [vmem:[%s1 + $0x40] sm:$0xff]
    %v44 = vld [vmem:[%s1 + $0x48] sm:$0xff]
    %v45 = vld [vmem:[%s1 + $0x50] sm:$0xff]
    %v46 = vld [vmem:[%s1 + $0x58] sm:$0xff]
    %v47 = vld [vmem:[%s1 + $0x60] sm:$0xff]
    %v48 = vld [vmem:[%s1 + $0x68] sm:$0xff]
    %v49 = vld [vmem:[%s1 + $0x70] sm:$0xff]
    %v50 = vld [vmem:[%s1 + $0x78] sm:$0xff]
    %v51 = vld [vmem:[%s1 + $0x80] sm:$0xff]
    %v52 = vld [vmem:[%s1 + $0x88] sm:$0xff]
    %v53 = vld [vmem:[%s1 + $0x90] sm:$0xff]
    %v54 = vld [vmem:[%s1 + $0x98] sm:$0xff]
    %v55 = vld [vmem:[%s1 + $0xa0] sm:$0xff]
    %v56 = vld [vmem:[%s1 + $0xa8] sm:$0xff]
    %v57 = vld [vmem:[%s1 + $0xb0] sm:$0xff]
    %v58 = vld [vmem:[%s1 + $0xb8] sm:$0xff]
    %v59 = vld [vmem:[%s1 + $0xc0] sm:$0xff]
    %v60 = vld [vmem:[%s1 + $0xc8] sm:$0xff]
    %v61 = vld [vmem:[%s1 + $0xd0] sm:$0xff]
    %v62 = vld [vmem:[%s1 + $0xd8] sm:$0xff]
    %v63 = vld [vmem:[%s1 + $0xe0] sm:$0xff]
    %v64 = vld [vmem:[%s1 + $0xe8] sm:$0xff]
    %v65 = vld [vmem:[%s1 + $0xf0] sm:$0xff]
    %v66 = vld [vmem:[%s1 + $0xf8] sm:$0xff]
    %67 = vmatprep.subr.mxu0 0.0
    %68 = vmatpush1.msra.mxu0 %v50
    %69 = vmatprep.subr.mxu0 0.0
    %70 = vmatpush1.msra.mxu0 %v49
    %71 = vmatprep.subr.mxu0 0.0
    %72 = vmatpush1.msra.mxu0 %v48
    %73 = vmatprep.subr.mxu0 0.0
    %74 = vmatpush1.msra.mxu0 %v47
    %75 = vmatprep.subr.mxu0 0.0
    %76 = vmatpush1.msra.mxu0 %v46
    %77 = vmatprep.subr.mxu0 0.0
    %78 = vmatpush1.msra.mxu0 %v45
    %79 = vmatprep.subr.mxu0 0.0
    %80 = vmatpush1.msra.mxu0 %v44
    %81 = vmatprep.subr.mxu0 0.0
    %82 = vmatpush1.msra.mxu0 %v43
    %83 = vmatprep.subr.mxu0 0.0
    %84 = vmatpush1.msra.mxu0 %v42
    %85 = vmatprep.subr.mxu0 0.0
    %86 = vmatpush1.msra.mxu0 %v41
    %87 = vmatprep.subr.mxu0 0.0
    %88 = vmatpush1.msra.mxu0 %v40
    %89 = vmatprep.subr.mxu0 0.0
    %90 = vmatpush1.msra.mxu0 %v39
    %91 = vmatprep.subr.mxu0 0.0
    %92 = vmatpush1.msra.mxu0 %v38
    %93 = vmatprep.subr.mxu0 0.0
    %94 = vmatpush1.msra.mxu0 %v37
    %95 = vmatprep.subr.mxu0 0.0
    %96 = vmatpush1.msra.mxu0 %v36
    %97 = vmatprep.subr.mxu0 0.0
    %98 = vmatpush1.msra.mxu0 %v35
    %99 = vmatprep.subr.mxu0 0.0
    %100 = vmatpush2.msra.mxu0 %v66
    %101 = vmatprep.subr.mxu0 0.0
    %102 = vmatpush2.msra.mxu0 %v65
    %103 = vmatprep.subr.mxu0 0.0
    %104 = vmatpush2.msra.mxu0 %v64
    %105 = vmatprep.subr.mxu0 0.0
    %106 = vmatpush2.msra.mxu0 %v63
    %107 = vmatprep.subr.mxu0 0.0
    %108 = vmatpush2.msra.mxu0 %v62
    %109 = vmatprep.subr.mxu0 0.0
    %110 = vmatpush2.msra.mxu0 %v61
    %111 = vmatprep.subr.mxu0 0.0
    %112 = vmatpush2.msra.mxu0 %v60
    %113 = vmatprep.subr.mxu0 0.0
    %114 = vmatpush2.msra.mxu0 %v59
    %115 = vmatprep.subr.mxu0 0.0
    %116 = vmatpush2.msra.mxu0 %v58
    %117 = vmatprep.subr.mxu0 0.0
    %118 = vmatpush2.msra.mxu0 %v57
    %119 = vmatprep.subr.mxu0 0.0
    %120 = vmatpush2.msra.mxu0 %v56
    %121 = vmatprep.subr.mxu0 0.0
    %122 = vmatpush2.msra.mxu0 %v55
    %123 = vmatprep.subr.mxu0 0.0
    %124 = vmatpush2.msra.mxu0 %v54
    %125 = vmatprep.subr.mxu0 0.0
    %126 = vmatpush2.msra.mxu0 %v53
    %127 = vmatprep.subr.mxu0 0.0
    %128 = vmatpush2.msra.mxu0 %v52
    %129 = vmatprep.subr.mxu0 0.0
    %130 = vmatpush2.msra.mxu0 %v51
    %131 = vmatprep.mubr.f32.mxu0 %v28
    %132 = vmatmul.mubr.f32.gmra.mxu0 %v27
    %v133 = vpop.f32.mrf.mxu0
    %v134 = vadd.f32 0.0, %v133
    %v135 = vpop.f32.mrf.mxu0
    %136 = vmatprep.mubr.f32.mxu0 %v30
    %137 = vmatmul.mubr.f32.gmra.mxu0 %v29
    %v138 = vpop.f32.mrf.mxu0
    %v139 = vadd.f32 0.0, %v138
    %v140 = vpop.f32.mrf.mxu0
    %141 = vmatprep.mubr.f32.mxu0 %v32
    %142 = vmatmul.mubr.f32.gmra.mxu0 %v31
    %v143 = vpop.f32.mrf.mxu0
    %v144 = vadd.f32 0.0, %v143
    %v145 = vpop.f32.mrf.mxu0
    %146 = vmatprep.mubr.f32.mxu0 %v34
    %147 = vmatmul.mubr.f32.gmra.mxu0 %v33
    %v148 = vpop.f32.mrf.mxu0
    %v149 = vadd.f32 0.0, %v148
    %v150 = vpop.f32.mrf.mxu0
    %151 = vdwg.mxu0
    %v152 = vadd.f32 %v23, %v134
    %v153 = vadd.f32 %v24, %v139
    %v154 = vadd.f32 %v25, %v144
    %v155 = vadd.f32 %v26, %v149
    %156 = vst [vmem:[#allocation2] sm:$0xff] %v152
    %157 = vst [vmem:[#allocation2 + $0x8] sm:$0xff] %v153
    %158 = vst [vmem:[#allocation2 + $0x10] sm:$0xff] %v154
    %159 = vst [vmem:[#allocation2 + $0x18] sm:$0xff] %v155
    // Predicated region
    $region18: #{patch_embedding_forward.1} parent=1 // pred_check
      %p160 = pneg %p15
    $region19: #{patch_embedding_forward.1} parent=1 // pred_check_branch
      %162 = sbr.rel (%p160) target = $region21
    $region20: #{patch_embedding_forward.1} parent=1 // pred_region
      %v163 = vld [vmem:[#allocation2] sm:$0xff]
      %v164 = vld [vmem:[#allocation2 + $0x8] sm:$0xff]
      %v165 = vld [vmem:[#allocation2 + $0x10] sm:$0xff]
      %v166 = vld [vmem:[#allocation2 + $0x18] sm:$0xff]
      %v167 = vld [vmem:[%s2] sm:$0x1]
      %v169 = vlaneseq
      %v170 = vshrl.u32 %v169, 7
      %v171 = vsub.s32 0, %v170
      %v172 = vrot.slane %v167, %v171
      %v174 = vadd.f32 %v163, %v172
      %v175 = vadd.f32 %v164, %v172
      %v176 = vadd.f32 %v165, %v172
      %v177 = vadd.f32 %v166, %v172
      %178 = vst [vmem:[#allocation3] sm:$0xff] %v174
      %179 = vst [vmem:[#allocation3 + $0x8] sm:$0xff] %v175
      %180 = vst [vmem:[#allocation3 + $0x10] sm:$0xff] %v176
      %181 = vst [vmem:[#allocation3 + $0x18] sm:$0xff] %v177
    $region21: #{patch_embedding_forward.1} parent=1 // pred_fallthru
      _
    // Predicated region
    $region22: #{patch_embedding_forward.1} parent=1 // pred_check
      _
    $region23: #{patch_embedding_forward.1} parent=1 // pred_check_branch
      %183 = sbr.rel (0) target = $region25
    $region24: #{patch_embedding_forward.1} parent=1 // pred_region
      %s185 = ssub.s32 512, 512
      %186 = vsyncadd [#allocation4], %s185
      %s187 = sshll.u32 [#allocation3], 4
      %s188 = int_to_ptr.vmem [resolvable:$true] %s187
      %193 = dma.vmem_to_hbm [thread:$0]  %s188, 512, %s3, [#allocation4], 128, 128, 8
    $region25: #{patch_embedding_forward.1} parent=1 // pred_fallthru
      _
    // Predicated region
    $region26: #{patch_embedding_forward.1} parent=1 // pred_check
      _
    $region27: #{patch_embedding_forward.1} parent=1 // pred_check_branch
      %195 = sbr.rel (0) target = $region29
    $region28: #{patch_embedding_forward.1} parent=1 // pred_region
      %196 = dma.done [#allocation4], 512
    $region29: #{patch_embedding_forward.1} parent=1 // pred_fallthru
      _
    %197 = vsyncpa [#allocation4], 1

</llo_original>
